<compile_context>
chip_gen: v7x
topology: tpu7x:2x2x1
jax: 0.10.0
libtpu: 0.0.40
codegen_flags: <defaults>
</compile_context>

<pallas_src>
import jax
import jax.numpy as jnp
from jax.experimental import pallas as pl
from jax.experimental.pallas import tpu as pltpu

SEQ_LEN = 50
VOCAB = 39
D_MODEL = 32


def _pos_embed_kernel(x_ref, emb_ref, pe_ref, o_ref):
    # x_ref  : (N, 1) int32   flattened token ids, N = B*S
    # emb_ref: (V, D) float32 embedding table
    # pe_ref : (S, D) float32 position table (NOT tiled; broadcast over batch in-kernel)
    # o_ref  : (N, D) float32
    N = x_ref.shape[0]
    V = emb_ref.shape[0]
    S = pe_ref.shape[0]
    B = N // S  # static Python int

    # NOTE: (N, 1) ids pad to a (104, 128) VMEM tile and the `==` needs a lane-broadcast.
    # Negligible at N=100; revisit (lane-major ids) only if this pattern is scaled up.
    ids = x_ref[...]                                              # (N, 1) int32
    # one-hot with V on the lane axis: onehot[n, v] = (x[n] == v)
    iota_v = jax.lax.broadcasted_iota(jnp.int32, (N, V), 1)       # (N, V)
    onehot = (iota_v == ids).astype(jnp.float32)                  # (N, V)

    # gather as one fused MXU matmul: (N, D) = onehot @ emb (contraction on LHS last dim).
    # HIGHEST precision keeps the f32 embedding rows exact (matches jnp.take to 1e-5).
    gathered = jnp.dot(
        onehot, emb_ref[...],
        preferred_element_type=jnp.float32,
        precision=jax.lax.Precision.HIGHEST,
    )                                                             # (N, D)

    pe = pe_ref[...]                                              # (S, D)
    # Broadcast pe over the static batch inside the kernel (no per-call HBM tile):
    # B tiny VPU add + store passes, all within VMEM.
    for b in range(B):
        lo, hi = b * S, (b + 1) * S
        o_ref[lo:hi, :] = gathered[lo:hi, :] + pe


def position_embedding(x, emb_table, pe):
    B, S = x.shape
    V, D = emb_table.shape
    assert pe.shape == (S, D)
    N = B * S

    # (B, S) -> (N, 1) is a layout-preserving reshape (effectively free); pe stays (S, D).
    x_flat = x.reshape(N, 1).astype(jnp.int32)

    vmem = lambda: pl.BlockSpec(memory_space=pltpu.MemorySpace.VMEM)

    out_flat = pl.pallas_call(
        _pos_embed_kernel,
        out_shape=jax.ShapeDtypeStruct((N, D), jnp.float32),
        in_specs=[vmem(), vmem(), vmem()],   # whole arrays, no grid, no pipeline
        out_specs=vmem(),
        cost_estimate=pl.CostEstimate(
            flops=2 * N * V * D,
            transcendentals=0,
            bytes_accessed=4 * (N + V * D + S * D + N * D),
        ),
    )(x_flat, emb_table, pe)

    return out_flat.reshape(B, S, D)


def make_pe_table(seq_len=SEQ_LEN, d_model=D_MODEL):
    # Matches the reference module's get_pe exactly:
    #   pe[pos, i] = sin(pos / 10000**(i/d)) if i % 2 == 0 else cos(pos / 10000**(i/d))
    # (this module uses exponent i/d for every column and sin/cos by column parity --
    #  intentionally NOT the canonical paper formula with 2i/d per pair).
    pos = jnp.arange(seq_len, dtype=jnp.float32)[:, None]         # (S, 1)
    i = jnp.arange(d_model, dtype=jnp.float32)[None, :]           # (1, D)
    angle = pos / (10000.0 ** (i / float(d_model)))               # (S, D)
    even = (jnp.arange(d_model) % 2) == 0
    return jnp.where(even[None, :], jnp.sin(angle), jnp.cos(angle)).astype(jnp.float32)


if __name__ == "__main__":
    key = jax.random.PRNGKey(0)
    k_x, k_w = jax.random.split(key)

    B = 2
    # deterministic parameter init: Embedding(39, 32), weight ~ N(0, 0.1)
    emb_table = (0.1 * jax.random.normal(k_w, (VOCAB, D_MODEL))).astype(jnp.float32)
    pe = make_pe_table()

    # input token ids, shape (B, 50), values in [0, 39)
    x = jax.random.randint(k_x, (B, SEQ_LEN), 0, VOCAB, dtype=jnp.int32)

    out = position_embedding(x, emb_table, pe)
    out = jax.block_until_ready(out)

    # pure-JAX reference check
    ref = jnp.take(emb_table, x, axis=0) + pe[None, :, :]
    assert out.shape == (B, SEQ_LEN, D_MODEL)
    assert jnp.allclose(out, ref, atol=1e-5, rtol=1e-5)

    print("KERNEL_OK")
</pallas_src>

<mosaic_0001>
module attributes {stable_mosaic.version = 11 : i64} {
  func.func @_pos_embed_kernel(%arg0: memref<100x1xi32, #tpu.memory_space<vmem>>, %arg1: memref<39x32xf32, #tpu.memory_space<vmem>>, %arg2: memref<50x32xf32, #tpu.memory_space<vmem>>, %arg3: memref<100x32xf32, #tpu.memory_space<vmem>>) attributes {dimension_semantics = [], scalar_prefetch = 0 : i64, scratch_operands = 0 : i64, tpu.core_type = #tpu.core_type<tc>} {
    %c0 = arith.constant 0 : index
    %c0_0 = arith.constant 0 : index
    %0 = vector.load %arg0[%c0, %c0_0] : memref<100x1xi32, #tpu.memory_space<vmem>>, vector<100x1xi32>
    %1 = tpu.iota {dimensions = array<i32: 1>} : vector<100x39xi32>
    %2 = vector.broadcast %0 : vector<100x1xi32> to vector<100x39xi32>
    %3 = arith.cmpi eq, %1, %2 : vector<100x39xi32>
    %4 = arith.extui %3 : vector<100x39xi1> to vector<100x39xi32>
    %5 = arith.sitofp %4 : vector<100x39xi32> to vector<100x39xf32>
    %c0_1 = arith.constant 0 : index
    %c0_2 = arith.constant 0 : index
    %6 = vector.load %arg1[%c0_1, %c0_2] : memref<39x32xf32, #tpu.memory_space<vmem>>, vector<39x32xf32>
    %cst = arith.constant dense<0.000000e+00> : vector<100x32xf32>
    %7 = tpu.matmul %5, %6, %cst {dimension_numbers = #tpu.dot_dimension_numbers<[1], [0], [0], [1], [0, 0, 1, 1], [], []>, precision = #tpu.contract_precision<fp32>} : vector<100x39xf32>, vector<39x32xf32>, vector<100x32xf32> -> vector<100x32xf32>
    %c0_3 = arith.constant 0 : index
    %c0_4 = arith.constant 0 : index
    %8 = vector.load %arg2[%c0_3, %c0_4] : memref<50x32xf32, #tpu.memory_space<vmem>>, vector<50x32xf32>
    %9 = vector.extract_strided_slice %7 {offsets = [0, 0], sizes = [50, 32], strides = [1, 1]} : vector<100x32xf32> to vector<50x32xf32>
    %10 = arith.addf %9, %8 : vector<50x32xf32>
    %c0_5 = arith.constant 0 : index
    %c0_6 = arith.constant 0 : index
    %11 = vector.load %arg3[%c0_5, %c0_6] : memref<100x32xf32, #tpu.memory_space<vmem>>, vector<50x32xf32>
    tpu.vector_store %arg3[%c0_5, %c0_6], %10 {strides = array<i32>} : memref<100x32xf32, #tpu.memory_space<vmem>>, vector<50x32xf32>,
    %12 = vector.extract_strided_slice %7 {offsets = [50, 0], sizes = [50, 32], strides = [1, 1]} : vector<100x32xf32> to vector<50x32xf32>
    %13 = arith.addf %12, %8 : vector<50x32xf32>
    %c50 = arith.constant 50 : index
    %c0_7 = arith.constant 0 : index
    %14 = vector.load %arg3[%c50, %c0_7] : memref<100x32xf32, #tpu.memory_space<vmem>>, vector<50x32xf32>
    tpu.vector_store %arg3[%c50, %c0_7], %13 {strides = array<i32>} : memref<100x32xf32, #tpu.memory_space<vmem>>, vector<50x32xf32>,
    return
  }
}

</mosaic_0001>

<llo_original>
// kernel: tpu_custom_call.1
$region0: #{tpu_custom_call.1}
  #allocation0 [shape = 'u32[]', space=smem, size = 0x4, offset = 0x4, fixed_abs, tag = 'smem constant byte address 0x4 - core index']
  #allocation1 [shape = 'u32[144,128]{1,0:T(1,128)}', space=vmem, size = 0x12000, scoped, tag = 'internal scratch']
  %s0 = inlined_call_operand.vmem [shape: s32[100,1], index: 0, kind: input, shape index: {}]
  %s1 = inlined_call_operand.vmem [shape: f32[39,32], index: 1, kind: input, shape index: {}]
  %s2 = inlined_call_operand.vmem [shape: f32[50,32], index: 2, kind: input, shape index: {}]
  %s3 = inlined_call_operand.vmem [shape: f32[100,32], index: 3, kind: output, shape index: {}]
  %s4 = sld [smem:[#allocation0]]
  $region22: #{tpu_custom_call.1} parent=0
    _
  %s6 = ssub.s32 1, %s4
  %s7 = scalar_select 0, %s6, %s4
  // Predicated region
  $region2: #{tpu_custom_call.1} parent=0 // pred_check
    _
  $region3: #{tpu_custom_call.1} parent=0 // pred_check_branch
    %9 = sbr.rel (0) target = $region5
  $region4: #{tpu_custom_call.1} parent=0 // pred_region
    _
  $region5: #{tpu_custom_call.1} parent=0 // pred_fallthru
    _
  // Predicated region
  $region6: #{tpu_custom_call.1} parent=0 // pred_check
    _
  $region7: #{tpu_custom_call.1} parent=0 // pred_check_branch
    %11 = sbr.rel (0) target = $region9
  $region8: #{tpu_custom_call.1} parent=0 // pred_region
    _
  $region9: #{tpu_custom_call.1} parent=0 // pred_fallthru
    _
  // Predicated region
  $region10: #{tpu_custom_call.1} parent=0 // pred_check
    _
  $region11: #{tpu_custom_call.1} parent=0 // pred_check_branch
    %13 = sbr.rel (0) target = $region13
  $region12: #{tpu_custom_call.1} parent=0 // pred_region
    _
  $region13: #{tpu_custom_call.1} parent=0 // pred_fallthru
    _
  %v14 = vld [vmem:[%s0] sm:$0xff]
  %v15 = vld [vmem:[%s0 + $0x8] sm:$0xff]
  %v16 = vld [vmem:[%s0 + $0x10] sm:$0xff]
  %v17 = vld [vmem:[%s0 + $0x18] sm:$0xff]
  %v18 = vld [vmem:[%s0 + $0x20] sm:$0xff]
  %v19 = vld [vmem:[%s0 + $0x28] sm:$0xff]
  %v20 = vld [vmem:[%s0 + $0x30] sm:$0xff]
  %v21 = vld [vmem:[%s0 + $0x38] sm:$0xff]
  %v22 = vld [vmem:[%s0 + $0x40] sm:$0xff]
  %v23 = vld [vmem:[%s0 + $0x48] sm:$0xff]
  %v24 = vld [vmem:[%s0 + $0x50] sm:$0xff]
  %v25 = vld [vmem:[%s0 + $0x58] sm:$0xff]
  %v26 = vld [vmem:[%s0 + $0x60] sm:$0xf]
  %v27 = vlaneseq
  %v28 = vand.u32 %v27, 127
  %29 = vset.pattern.permute.xlu0 0
  %30 = vperm.xlu0 %29, %v14
  %v31 = vpop.permute.xlu0 %30
  %32 = vset.pattern.permute.xlu0 0
  %33 = vperm.xlu0 %32, %v15
  %v34 = vpop.permute.xlu0 %33
  %35 = vset.pattern.permute.xlu0 0
  %36 = vperm.xlu0 %35, %v16
  %v37 = vpop.permute.xlu0 %36
  %38 = vset.pattern.permute.xlu0 0
  %39 = vperm.xlu0 %38, %v17
  %v40 = vpop.permute.xlu0 %39
  %41 = vset.pattern.permute.xlu0 0
  %42 = vperm.xlu0 %41, %v18
  %v43 = vpop.permute.xlu0 %42
  %44 = vset.pattern.permute.xlu0 0
  %45 = vperm.xlu0 %44, %v19
  %v46 = vpop.permute.xlu0 %45
  %47 = vset.pattern.permute.xlu0 0
  %48 = vperm.xlu0 %47, %v20
  %v49 = vpop.permute.xlu0 %48
  %50 = vset.pattern.permute.xlu0 0
  %51 = vperm.xlu0 %50, %v21
  %v52 = vpop.permute.xlu0 %51
  %53 = vset.pattern.permute.xlu0 0
  %54 = vperm.xlu0 %53, %v22
  %v55 = vpop.permute.xlu0 %54
  %56 = vset.pattern.permute.xlu0 0
  %57 = vperm.xlu0 %56, %v23
  %v58 = vpop.permute.xlu0 %57
  %59 = vset.pattern.permute.xlu0 0
  %60 = vperm.xlu0 %59, %v24
  %v61 = vpop.permute.xlu0 %60
  %62 = vset.pattern.permute.xlu0 0
  %63 = vperm.xlu0 %62, %v25
  %v64 = vpop.permute.xlu0 %63
  %65 = vset.pattern.permute.xlu0 0
  %66 = vperm.xlu0 %65, %v26
  %v67 = vpop.permute.xlu0 %66
  %vm68 = vcmp.eq.s32.totalorder %v28, %v31
  %vm69 = vcmp.eq.s32.totalorder %v28, %v34
  %vm70 = vcmp.eq.s32.totalorder %v28, %v37
  %vm71 = vcmp.eq.s32.totalorder %v28, %v40
  %vm72 = vcmp.eq.s32.totalorder %v28, %v43
  %vm73 = vcmp.eq.s32.totalorder %v28, %v46
  %vm74 = vcmp.eq.s32.totalorder %v28, %v49
  %vm75 = vcmp.eq.s32.totalorder %v28, %v52
  %vm76 = vcmp.eq.s32.totalorder %v28, %v55
  %vm77 = vcmp.eq.s32.totalorder %v28, %v58
  %vm78 = vcmp.eq.s32.totalorder %v28, %v61
  %vm79 = vcmp.eq.s32.totalorder %v28, %v64
  %vm80 = vcmp.eq.s32.totalorder %v28, %v67
  %v81 = vsel %vm68, 1, 0
  %v82 = vsel %vm69, 1, 0
  %v83 = vsel %vm70, 1, 0
  %v84 = vsel %vm71, 1, 0
  %v85 = vsel %vm72, 1, 0
  %v86 = vsel %vm73, 1, 0
  %v87 = vsel %vm74, 1, 0
  %v88 = vsel %vm75, 1, 0
  %v89 = vsel %vm76, 1, 0
  %v90 = vsel %vm77, 1, 0
  %v91 = vsel %vm78, 1, 0
  %v92 = vsel %vm79, 1, 0
  %v93 = vsel %vm80, 1, 0
  %v94 = vcvt.s32.f32 %v81
  %v95 = vcvt.s32.f32 %v82
  %v96 = vcvt.s32.f32 %v83
  %v97 = vcvt.s32.f32 %v84
  %v98 = vcvt.s32.f32 %v85
  %v99 = vcvt.s32.f32 %v86
  %v100 = vcvt.s32.f32 %v87
  %v101 = vcvt.s32.f32 %v88
  %v102 = vcvt.s32.f32 %v89
  %v103 = vcvt.s32.f32 %v90
  %v104 = vcvt.s32.f32 %v91
  %v105 = vcvt.s32.f32 %v92
  %v106 = vcvt.s32.f32 %v93
  %v107 = vld [vmem:[%s1] sm:$0xff]
  %v108 = vld [vmem:[%s1 + $0x8] sm:$0xff]
  %v109 = vld [vmem:[%s1 + $0x10] sm:$0xff]
  %v110 = vld [vmem:[%s1 + $0x18] sm:$0xff]
  %v111 = vld [vmem:[%s1 + $0x20] sm:$0x7f]
  %vm112 = vcmask 318464
  %v114 = vsel %vm112, %v94, 0
  %v117 = vsel %vm112, %v95, 0
  %v120 = vsel %vm112, %v96, 0
  %v123 = vsel %vm112, %v97, 0
  %v126 = vsel %vm112, %v98, 0
  %v129 = vsel %vm112, %v99, 0
  %v132 = vsel %vm112, %v100, 0
  %v135 = vsel %vm112, %v101, 0
  %v138 = vsel %vm112, %v102, 0
  %v141 = vsel %vm112, %v103, 0
  %v144 = vsel %vm112, %v104, 0
  %v147 = vsel %vm112, %v105, 0
  %v150 = vsel %vm112, %v106, 0
  %vm152 = vcmask 1046528
  %v154 = vsel %vm152, %v111, 0
  %156 = vmatprep.subr.mxu0 0.0
  %v157 = vand.u32 %v107, 4294901760
  %158 = vmatpush1.msra.mxu0 %v157
  %159 = vmatprep.subr.mxu0 0.0
  %v160 = vand.u32 %v108, 4294901760
  %161 = vmatpush1.msra.mxu0 %v160
  %162 = vmatprep.subr.mxu0 0.0
  %v163 = vand.u32 %v109, 4294901760
  %164 = vmatpush1.msra.mxu0 %v163
  %165 = vmatprep.subr.mxu0 0.0
  %v166 = vand.u32 %v110, 4294901760
  %167 = vmatpush1.msra.mxu0 %v166
  %168 = vmatprep.subr.mxu0 0.0
  %v169 = vand.u32 %v154, 4294901760
  %170 = vmatpush1.msra.mxu0 %v169
  %171 = vmatprep.subr.mxu0 0.0
  %172 = vmatpush1.msra.mxu0 0.0
  %173 = vmatprep.subr.mxu0 0.0
  %174 = vmatpush1.msra.mxu0 0.0
  %175 = vmatprep.subr.mxu0 0.0
  %176 = vmatpush1.msra.mxu0 0.0
  %177 = vmatprep.subr.mxu0 0.0
  %178 = vmatpush1.msra.mxu0 0.0
  %179 = vmatprep.subr.mxu0 0.0
  %180 = vmatpush1.msra.mxu0 0.0
  %181 = vmatprep.subr.mxu0 0.0
  %182 = vmatpush1.msra.mxu0 0.0
  %183 = vmatprep.subr.mxu0 0.0
  %184 = vmatpush1.msra.mxu0 0.0
  %185 = vmatprep.subr.mxu0 0.0
  %186 = vmatpush1.msra.mxu0 0.0
  %187 = vmatprep.subr.mxu0 0.0
  %188 = vmatpush1.msra.mxu0 0.0
  %189 = vmatprep.subr.mxu0 0.0
  %190 = vmatpush1.msra.mxu0 0.0
  %191 = vmatprep.subr.mxu0 0.0
  %192 = vmatpush1.msra.mxu0 0.0
  %193 = vmatprep.subr.mxu0 0.0
  %194 = vmatpush1.msra.mxu0 0.0
  %195 = vmatprep.subr.mxu0 0.0
  %196 = vmatpush1.msra.mxu0 0.0
  %197 = vmatprep.subr.mxu0 0.0
  %198 = vmatpush1.msra.mxu0 0.0
  %199 = vmatprep.subr.mxu0 0.0
  %200 = vmatpush1.msra.mxu0 0.0
  %201 = vmatprep.subr.mxu0 0.0
  %202 = vmatpush1.msra.mxu0 0.0
  %203 = vmatprep.subr.mxu0 0.0
  %204 = vmatpush1.msra.mxu0 0.0
  %205 = vmatprep.subr.mxu0 0.0
  %206 = vmatpush1.msra.mxu0 0.0
  %207 = vmatprep.subr.mxu0 0.0
  %208 = vmatpush1.msra.mxu0 0.0
  %209 = vmatprep.subr.mxu0 0.0
  %210 = vmatpush1.msra.mxu0 0.0
  %211 = vmatprep.subr.mxu0 0.0
  %212 = vmatpush1.msra.mxu0 0.0
  %213 = vmatprep.subr.mxu0 0.0
  %214 = vmatpush1.msra.mxu0 0.0
  %215 = vmatprep.subr.mxu0 0.0
  %216 = vmatpush1.msra.mxu0 0.0
  %217 = vmatprep.subr.mxu0 0.0
  %218 = vmatpush1.msra.mxu0 0.0
  %219 = vmatprep.subr.mxu0 0.0
  %220 = vmatpush1.msra.mxu0 0.0
  %221 = vmatprep.subr.mxu0 0.0
  %222 = vmatpush1.msra.mxu0 0.0
  %223 = vmatprep.subr.mxu0 0.0
  %224 = vmatpush1.msra.mxu0 0.0
  %225 = vmatprep.mubr.f32.mxu0 0.0
  %v226 = vand.u32 %v114, 4294901760
  %v227 = vsub.f32 %v114, %v226
  %v228 = vand.u32 %v227, 4294901760
  %v229 = vsub.f32 %v227, %v228
  %v230 = vand.u32 %v229, 4294901760
  %231 = vmatmul.mubr.f32.gmra.mrb[0].mxu0 %v230
  %v232 = vpop.f32.mrb[0].mxu0
  %v233 = vadd.f32 0.0, %v232
  %v234 = vpop.f32.mrb[0].mxu0
  %235 = vmatprep.mubr.f32.mxu0 0.0
  %v236 = vand.u32 %v117, 4294901760
  %v237 = vsub.f32 %v117, %v236
  %v238 = vand.u32 %v237, 4294901760
  %v239 = vsub.f32 %v237, %v238
  %v240 = vand.u32 %v239, 4294901760
  %241 = vmatmul.mubr.f32.gmra.mrb[0].mxu0 %v240
  %v242 = vpop.f32.mrb[0].mxu0
  %v243 = vadd.f32 0.0, %v242
  %v244 = vpop.f32.mrb[0].mxu0
  %245 = vmatprep.mubr.f32.mxu0 0.0
  %v246 = vand.u32 %v120, 4294901760
  %v247 = vsub.f32 %v120, %v246
  %v248 = vand.u32 %v247, 4294901760
  %v249 = vsub.f32 %v247, %v248
  %v250 = vand.u32 %v249, 4294901760
  %251 = vmatmul.mubr.f32.gmra.mrb[0].mxu0 %v250
  %v252 = vpop.f32.mrb[0].mxu0
  %v253 = vadd.f32 0.0, %v252
  %v254 = vpop.f32.mrb[0].mxu0
  %255 = vmatprep.mubr.f32.mxu0 0.0
  %v256 = vand.u32 %v123, 4294901760
  %v257 = vsub.f32 %v123, %v256
  %v258 = vand.u32 %v257, 4294901760
  %v259 = vsub.f32 %v257, %v258
  %v260 = vand.u32 %v259, 4294901760
  %261 = vmatmul.mubr.f32.gmra.mrb[0].mxu0 %v260
  %v262 = vpop.f32.mrb[0].mxu0
  %v263 = vadd.f32 0.0, %v262
  %v264 = vpop.f32.mrb[0].mxu0
  %265 = vmatprep.mubr.f32.mxu0 0.0
  %v266 = vand.u32 %v126, 4294901760
  %v267 = vsub.f32 %v126, %v266
  %v268 = vand.u32 %v267, 4294901760
  %v269 = vsub.f32 %v267, %v268
  %v270 = vand.u32 %v269, 4294901760
  %271 = vmatmul.mubr.f32.gmra.mrb[0].mxu0 %v270
  %v272 = vpop.f32.mrb[0].mxu0
  %v273 = vadd.f32 0.0, %v272
  %v274 = vpop.f32.mrb[0].mxu0
  %275 = vmatprep.mubr.f32.mxu0 0.0
  %v276 = vand.u32 %v129, 4294901760
  %v277 = vsub.f32 %v129, %v276
  %v278 = vand.u32 %v277, 4294901760
  %v279 = vsub.f32 %v277, %v278
  %v280 = vand.u32 %v279, 4294901760
  %281 = vmatmul.mubr.f32.gmra.mrb[0].mxu0 %v280
  %v282 = vpop.f32.mrb[0].mxu0
  %v283 = vadd.f32 0.0, %v282
  %v284 = vpop.f32.mrb[0].mxu0
  %285 = vmatprep.mubr.f32.mxu0 0.0
  %v286 = vand.u32 %v132, 4294901760
  %v287 = vsub.f32 %v132, %v286
  %v288 = vand.u32 %v287, 4294901760
  %v289 = vsub.f32 %v287, %v288
  %v290 = vand.u32 %v289, 4294901760
  %291 = vmatmul.mubr.f32.gmra.mrb[0].mxu0 %v290
  %v292 = vpop.f32.mrb[0].mxu0
  %v293 = vadd.f32 0.0, %v292
  %v294 = vpop.f32.mrb[0].mxu0
  %295 = vmatprep.mubr.f32.mxu0 0.0
  %v296 = vand.u32 %v135, 4294901760
  %v297 = vsub.f32 %v135, %v296
  %v298 = vand.u32 %v297, 4294901760
  %v299 = vsub.f32 %v297, %v298
  %v300 = vand.u32 %v299, 4294901760
  %301 = vmatmul.mubr.f32.gmra.mrb[0].mxu0 %v300
  %v302 = vpop.f32.mrb[0].mxu0
  %v303 = vadd.f32 0.0, %v302
  %v304 = vpop.f32.mrb[0].mxu0
  %305 = vmatprep.mubr.f32.mxu0 0.0
  %v306 = vand.u32 %v138, 4294901760
  %v307 = vsub.f32 %v138, %v306
  %v308 = vand.u32 %v307, 4294901760
  %v309 = vsub.f32 %v307, %v308
  %v310 = vand.u32 %v309, 4294901760
  %311 = vmatmul.mubr.f32.gmra.mrb[0].mxu0 %v310
  %v312 = vpop.f32.mrb[0].mxu0
  %v313 = vadd.f32 0.0, %v312
  %v314 = vpop.f32.mrb[0].mxu0
  %315 = vmatprep.mubr.f32.mxu0 0.0
  %v316 = vand.u32 %v141, 4294901760
  %v317 = vsub.f32 %v141, %v316
  %v318 = vand.u32 %v317, 4294901760
  %v319 = vsub.f32 %v317, %v318
  %v320 = vand.u32 %v319, 4294901760
  %321 = vmatmul.mubr.f32.gmra.mrb[0].mxu0 %v320
  %v322 = vpop.f32.mrb[0].mxu0
  %v323 = vadd.f32 0.0, %v322
  %v324 = vpop.f32.mrb[0].mxu0
  %325 = vmatprep.mubr.f32.mxu0 0.0
  %v326 = vand.u32 %v144, 4294901760
  %v327 = vsub.f32 %v144, %v326
  %v328 = vand.u32 %v327, 4294901760
  %v329 = vsub.f32 %v327, %v328
  %v330 = vand.u32 %v329, 4294901760
  %331 = vmatmul.mubr.f32.gmra.mrb[0].mxu0 %v330
  %v332 = vpop.f32.mrb[0].mxu0
  %v333 = vadd.f32 0.0, %v332
  %v334 = vpop.f32.mrb[0].mxu0
  %335 = vmatprep.mubr.f32.mxu0 0.0
  %v336 = vand.u32 %v147, 4294901760
  %v337 = vsub.f32 %v147, %v336
  %v338 = vand.u32 %v337, 4294901760
  %v339 = vsub.f32 %v337, %v338
  %v340 = vand.u32 %v339, 4294901760
  %341 = vmatmul.mubr.f32.gmra.mrb[0].mxu0 %v340
  %v342 = vpop.f32.mrb[0].mxu0
  %v343 = vadd.f32 0.0, %v342
  %v344 = vpop.f32.mrb[0].mxu0
  %345 = vmatprep.mubr.f32.mxu0 0.0
  %v346 = vand.u32 %v150, 4294901760
  %v347 = vsub.f32 %v150, %v346
  %v348 = vand.u32 %v347, 4294901760
  %v349 = vsub.f32 %v347, %v348
  %v350 = vand.u32 %v349, 4294901760
  %351 = vmatmul.mubr.f32.gmra.mrb[0].mxu0 %v350
  %v352 = vpop.f32.mrb[0].mxu0
  %v353 = vadd.f32 0.0, %v352
  %v354 = vpop.f32.mrb[0].mxu0
  %355 = vdwg.mxu0
  %356 = vmatprep.subr.mxu0 0.0
  %v357 = vand.u32 %v107, 4294901760
  %v358 = vsub.f32 %v107, %v357
  %v359 = vand.u32 %v358, 4294901760
  %v360 = vsub.f32 %v358, %v359
  %v361 = vand.u32 %v360, 4294901760
  %362 = vmatpush1.msra.mxu0 %v361
  %363 = vmatprep.subr.mxu0 0.0
  %v364 = vand.u32 %v108, 4294901760
  %v365 = vsub.f32 %v108, %v364
  %v366 = vand.u32 %v365, 4294901760
  %v367 = vsub.f32 %v365, %v366
  %v368 = vand.u32 %v367, 4294901760
  %369 = vmatpush1.msra.mxu0 %v368
  %370 = vmatprep.subr.mxu0 0.0
  %v371 = vand.u32 %v109, 4294901760
  %v372 = vsub.f32 %v109, %v371
  %v373 = vand.u32 %v372, 4294901760
  %v374 = vsub.f32 %v372, %v373
  %v375 = vand.u32 %v374, 4294901760
  %376 = vmatpush1.msra.mxu0 %v375
  %377 = vmatprep.subr.mxu0 0.0
  %v378 = vand.u32 %v110, 4294901760
  %v379 = vsub.f32 %v110, %v378
  %v380 = vand.u32 %v379, 4294901760
  %v381 = vsub.f32 %v379, %v380
  %v382 = vand.u32 %v381, 4294901760
  %383 = vmatpush1.msra.mxu0 %v382
  %384 = vmatprep.subr.mxu0 0.0
  %v385 = vand.u32 %v154, 4294901760
  %v386 = vsub.f32 %v154, %v385
  %v387 = vand.u32 %v386, 4294901760
  %v388 = vsub.f32 %v386, %v387
  %v389 = vand.u32 %v388, 4294901760
  %390 = vmatpush1.msra.mxu0 %v389
  %391 = vmatprep.subr.mxu0 0.0
  %392 = vmatpush1.msra.mxu0 0.0
  %393 = vmatprep.subr.mxu0 0.0
  %394 = vmatpush1.msra.mxu0 0.0
  %395 = vmatprep.subr.mxu0 0.0
  %396 = vmatpush1.msra.mxu0 0.0
  %397 = vmatprep.subr.mxu0 0.0
  %398 = vmatpush1.msra.mxu0 0.0
  %399 = vmatprep.subr.mxu0 0.0
  %400 = vmatpush1.msra.mxu0 0.0
  %401 = vmatprep.subr.mxu0 0.0
  %402 = vmatpush1.msra.mxu0 0.0
  %403 = vmatprep.subr.mxu0 0.0
  %404 = vmatpush1.msra.mxu0 0.0
  %405 = vmatprep.subr.mxu0 0.0
  %406 = vmatpush1.msra.mxu0 0.0
  %407 = vmatprep.subr.mxu0 0.0
  %408 = vmatpush1.msra.mxu0 0.0
  %409 = vmatprep.subr.mxu0 0.0
  %410 = vmatpush1.msra.mxu0 0.0
  %411 = vmatprep.subr.mxu0 0.0
  %412 = vmatpush1.msra.mxu0 0.0
  %413 = vmatprep.subr.mxu0 0.0
  %414 = vmatpush1.msra.mxu0 0.0
  %415 = vmatprep.subr.mxu0 0.0
  %416 = vmatpush1.msra.mxu0 0.0
  %417 = vmatprep.subr.mxu0 0.0
  %418 = vmatpush1.msra.mxu0 0.0
  %419 = vmatprep.subr.mxu0 0.0
  %420 = vmatpush1.msra.mxu0 0.0
  %421 = vmatprep.subr.mxu0 0.0
  %422 = vmatpush1.msra.mxu0 0.0
  %423 = vmatprep.subr.mxu0 0.0
  %424 = vmatpush1.msra.mxu0 0.0
  %425 = vmatprep.subr.mxu0 0.0
  %426 = vmatpush1.msra.mxu0 0.0
  %427 = vmatprep.subr.mxu0 0.0
  %428 = vmatpush1.msra.mxu0 0.0
  %429 = vmatprep.subr.mxu0 0.0
  %430 = vmatpush1.msra.mxu0 0.0
  %431 = vmatprep.subr.mxu0 0.0
  %432 = vmatpush1.msra.mxu0 0.0
  %433 = vmatprep.subr.mxu0 0.0
  %434 = vmatpush1.msra.mxu0 0.0
  %435 = vmatprep.subr.mxu0 0.0
  %436 = vmatpush1.msra.mxu0 0.0
  %437 = vmatprep.subr.mxu0 0.0
  %438 = vmatpush1.msra.mxu0 0.0
  %439 = vmatprep.subr.mxu0 0.0
  %440 = vmatpush1.msra.mxu0 0.0
  %441 = vmatprep.subr.mxu0 0.0
  %442 = vmatpush1.msra.mxu0 0.0
  %443 = vmatprep.subr.mxu0 0.0
  %444 = vmatpush1.msra.mxu0 0.0
  %445 = vmatprep.mubr.f32.mxu0 0.0
  %v446 = vand.u32 %v114, 4294901760
  %447 = vmatmul.mubr.f32.gmra.mrb[0].mxu0 %v446
  %v448 = vpop.f32.mrb[0].mxu0
  %v449 = vadd.f32 %v233, %v448
  %v450 = vpop.f32.mrb[0].mxu0
  %451 = vmatprep.mubr.f32.mxu0 0.0
  %v452 = vand.u32 %v117, 4294901760
  %453 = vmatmul.mubr.f32.gmra.mrb[0].mxu0 %v452
  %v454 = vpop.f32.mrb[0].mxu0
  %v455 = vadd.f32 %v243, %v454
  %v456 = vpop.f32.mrb[0].mxu0
  %457 = vmatprep.mubr.f32.mxu0 0.0
  %v458 = vand.u32 %v120, 4294901760
  %459 = vmatmul.mubr.f32.gmra.mrb[0].mxu0 %v458
  %v460 = vpop.f32.mrb[0].mxu0
  %v461 = vadd.f32 %v253, %v460
  %v462 = vpop.f32.mrb[0].mxu0
  %463 = vmatprep.mubr.f32.mxu0 0.0
  %v464 = vand.u32 %v123, 4294901760
  %465 = vmatmul.mubr.f32.gmra.mrb[0].mxu0 %v464
  %v466 = vpop.f32.mrb[0].mxu0
  %v467 = vadd.f32 %v263, %v466
  %v468 = vpop.f32.mrb[0].mxu0
  %469 = vmatprep.mubr.f32.mxu0 0.0
  %v470 = vand.u32 %v126, 4294901760
  %471 = vmatmul.mubr.f32.gmra.mrb[0].mxu0 %v470
  %v472 = vpop.f32.mrb[0].mxu0
  %v473 = vadd.f32 %v273, %v472
  %v474 = vpop.f32.mrb[0].mxu0
  %475 = vmatprep.mubr.f32.mxu0 0.0
  %v476 = vand.u32 %v129, 4294901760
  %477 = vmatmul.mubr.f32.gmra.mrb[0].mxu0 %v476
  %v478 = vpop.f32.mrb[0].mxu0
  %v479 = vadd.f32 %v283, %v478
  %v480 = vpop.f32.mrb[0].mxu0
  %481 = vmatprep.mubr.f32.mxu0 0.0
  %v482 = vand.u32 %v132, 4294901760
  %483 = vmatmul.mubr.f32.gmra.mrb[0].mxu0 %v482
  %v484 = vpop.f32.mrb[0].mxu0
  %v485 = vadd.f32 %v293, %v484
  %v486 = vpop.f32.mrb[0].mxu0
  %487 = vmatprep.mubr.f32.mxu0 0.0
  %v488 = vand.u32 %v135, 4294901760
  %489 = vmatmul.mubr.f32.gmra.mrb[0].mxu0 %v488
  %v490 = vpop.f32.mrb[0].mxu0
  %v491 = vadd.f32 %v303, %v490
  %v492 = vpop.f32.mrb[0].mxu0
  %493 = vmatprep.mubr.f32.mxu0 0.0
  %v494 = vand.u32 %v138, 4294901760
  %495 = vmatmul.mubr.f32.gmra.mrb[0].mxu0 %v494
  %v496 = vpop.f32.mrb[0].mxu0
  %v497 = vadd.f32 %v313, %v496
  %v498 = vpop.f32.mrb[0].mxu0
  %499 = vmatprep.mubr.f32.mxu0 0.0
  %v500 = vand.u32 %v141, 4294901760
  %501 = vmatmul.mubr.f32.gmra.mrb[0].mxu0 %v500
  %v502 = vpop.f32.mrb[0].mxu0
  %v503 = vadd.f32 %v323, %v502
  %v504 = vpop.f32.mrb[0].mxu0
  %505 = vmatprep.mubr.f32.mxu0 0.0
  %v506 = vand.u32 %v144, 4294901760
  %507 = vmatmul.mubr.f32.gmra.mrb[0].mxu0 %v506
  %v508 = vpop.f32.mrb[0].mxu0
  %v509 = vadd.f32 %v333, %v508
  %v510 = vpop.f32.mrb[0].mxu0
  %511 = vmatprep.mubr.f32.mxu0 0.0
  %v512 = vand.u32 %v147, 4294901760
  %513 = vmatmul.mubr.f32.gmra.mrb[0].mxu0 %v512
  %v514 = vpop.f32.mrb[0].mxu0
  %v515 = vadd.f32 %v343, %v514
  %v516 = vpop.f32.mrb[0].mxu0
  %517 = vmatprep.mubr.f32.mxu0 0.0
  %v518 = vand.u32 %v150, 4294901760
  %519 = vmatmul.mubr.f32.gmra.mrb[0].mxu0 %v518
  %v520 = vpop.f32.mrb[0].mxu0
  %v521 = vadd.f32 %v353, %v520
  %v522 = vpop.f32.mrb[0].mxu0
  %523 = vdwg.mxu0
  %524 = vmatprep.subr.mxu0 0.0
  %v525 = vand.u32 %v107, 4294901760
  %v526 = vsub.f32 %v107, %v525
  %527 = vmatpush1.msra.mxu0 %v526
  %528 = vmatprep.subr.mxu0 0.0
  %v529 = vand.u32 %v108, 4294901760
  %v530 = vsub.f32 %v108, %v529
  %531 = vmatpush1.msra.mxu0 %v530
  %532 = vmatprep.subr.mxu0 0.0
  %v533 = vand.u32 %v109, 4294901760
  %v534 = vsub.f32 %v109, %v533
  %535 = vmatpush1.msra.mxu0 %v534
  %536 = vmatprep.subr.mxu0 0.0
  %v537 = vand.u32 %v110, 4294901760
  %v538 = vsub.f32 %v110, %v537
  %539 = vmatpush1.msra.mxu0 %v538
  %540 = vmatprep.subr.mxu0 0.0
  %v541 = vand.u32 %v154, 4294901760
  %v542 = vsub.f32 %v154, %v541
  %543 = vmatpush1.msra.mxu0 %v542
  %544 = vmatprep.subr.mxu0 0.0
  %545 = vmatpush1.msra.mxu0 0.0
  %546 = vmatprep.subr.mxu0 0.0
  %547 = vmatpush1.msra.mxu0 0.0
  %548 = vmatprep.subr.mxu0 0.0
  %549 = vmatpush1.msra.mxu0 0.0
  %550 = vmatprep.subr.mxu0 0.0
  %551 = vmatpush1.msra.mxu0 0.0
  %552 = vmatprep.subr.mxu0 0.0
  %553 = vmatpush1.msra.mxu0 0.0
  %554 = vmatprep.subr.mxu0 0.0
  %555 = vmatpush1.msra.mxu0 0.0
  %556 = vmatprep.subr.mxu0 0.0
  %557 = vmatpush1.msra.mxu0 0.0
  %558 = vmatprep.subr.mxu0 0.0
  %559 = vmatpush1.msra.mxu0 0.0
  %560 = vmatprep.subr.mxu0 0.0
  %561 = vmatpush1.msra.mxu0 0.0
  %562 = vmatprep.subr.mxu0 0.0
  %563 = vmatpush1.msra.mxu0 0.0
  %564 = vmatprep.subr.mxu0 0.0
  %565 = vmatpush1.msra.mxu0 0.0
  %566 = vmatprep.subr.mxu0 0.0
  %567 = vmatpush1.msra.mxu0 0.0
  %568 = vmatprep.subr.mxu0 0.0
  %569 = vmatpush1.msra.mxu0 0.0
  %570 = vmatprep.subr.mxu0 0.0
  %571 = vmatpush1.msra.mxu0 0.0
  %572 = vmatprep.subr.mxu0 0.0
  %573 = vmatpush1.msra.mxu0 0.0
  %574 = vmatprep.subr.mxu0 0.0
  %575 = vmatpush1.msra.mxu0 0.0
  %576 = vmatprep.subr.mxu0 0.0
  %577 = vmatpush1.msra.mxu0 0.0
  %578 = vmatprep.subr.mxu0 0.0
  %579 = vmatpush1.msra.mxu0 0.0
  %580 = vmatprep.subr.mxu0 0.0
  %581 = vmatpush1.msra.mxu0 0.0
  %582 = vmatprep.subr.mxu0 0.0
  %583 = vmatpush1.msra.mxu0 0.0
  %584 = vmatprep.subr.mxu0 0.0
  %585 = vmatpush1.msra.mxu0 0.0
  %586 = vmatprep.subr.mxu0 0.0
  %587 = vmatpush1.msra.mxu0 0.0
  %588 = vmatprep.subr.mxu0 0.0
  %589 = vmatpush1.msra.mxu0 0.0
  %590 = vmatprep.subr.mxu0 0.0
  %591 = vmatpush1.msra.mxu0 0.0
  %592 = vmatprep.subr.mxu0 0.0
  %593 = vmatpush1.msra.mxu0 0.0
  %594 = vmatprep.subr.mxu0 0.0
  %595 = vmatpush1.msra.mxu0 0.0
  %596 = vmatprep.subr.mxu0 0.0
  %597 = vmatpush1.msra.mxu0 0.0
  %598 = vmatprep.mubr.f32.mxu0 0.0
  %v599 = vand.u32 %v114, 4294901760
  %v600 = vsub.f32 %v114, %v599
  %601 = vmatmul.mubr.f32.gmra.mrb[0].mxu0 %v600
  %v602 = vpop.f32.mrb[0].mxu0
  %v603 = vadd.f32 %v449, %v602
  %v604 = vpop.f32.mrb[0].mxu0
  %605 = vmatprep.mubr.f32.mxu0 0.0
  %v606 = vand.u32 %v117, 4294901760
  %v607 = vsub.f32 %v117, %v606
  %608 = vmatmul.mubr.f32.gmra.mrb[0].mxu0 %v607
  %v609 = vpop.f32.mrb[0].mxu0
  %v610 = vadd.f32 %v455, %v609
  %v611 = vpop.f32.mrb[0].mxu0
  %612 = vmatprep.mubr.f32.mxu0 0.0
  %v613 = vand.u32 %v120, 4294901760
  %v614 = vsub.f32 %v120, %v613
  %615 = vmatmul.mubr.f32.gmra.mrb[0].mxu0 %v614
  %v616 = vpop.f32.mrb[0].mxu0
  %v617 = vadd.f32 %v461, %v616
  %v618 = vpop.f32.mrb[0].mxu0
  %619 = vmatprep.mubr.f32.mxu0 0.0
  %v620 = vand.u32 %v123, 4294901760
  %v621 = vsub.f32 %v123, %v620
  %622 = vmatmul.mubr.f32.gmra.mrb[0].mxu0 %v621
  %v623 = vpop.f32.mrb[0].mxu0
  %v624 = vadd.f32 %v467, %v623
  %v625 = vpop.f32.mrb[0].mxu0
  %626 = vmatprep.mubr.f32.mxu0 0.0
  %v627 = vand.u32 %v126, 4294901760
  %v628 = vsub.f32 %v126, %v627
  %629 = vmatmul.mubr.f32.gmra.mrb[0].mxu0 %v628
  %v630 = vpop.f32.mrb[0].mxu0
  %v631 = vadd.f32 %v473, %v630
  %v632 = vpop.f32.mrb[0].mxu0
  %633 = vmatprep.mubr.f32.mxu0 0.0
  %v634 = vand.u32 %v129, 4294901760
  %v635 = vsub.f32 %v129, %v634
  %636 = vmatmul.mubr.f32.gmra.mrb[0].mxu0 %v635
  %v637 = vpop.f32.mrb[0].mxu0
  %v638 = vadd.f32 %v479, %v637
  %v639 = vpop.f32.mrb[0].mxu0
  %640 = vmatprep.mubr.f32.mxu0 0.0
  %v641 = vand.u32 %v132, 4294901760
  %v642 = vsub.f32 %v132, %v641
  %643 = vmatmul.mubr.f32.gmra.mrb[0].mxu0 %v642
  %v644 = vpop.f32.mrb[0].mxu0
  %v645 = vadd.f32 %v485, %v644
  %v646 = vpop.f32.mrb[0].mxu0
  %647 = vmatprep.mubr.f32.mxu0 0.0
  %v648 = vand.u32 %v135, 4294901760
  %v649 = vsub.f32 %v135, %v648
  %650 = vmatmul.mubr.f32.gmra.mrb[0].mxu0 %v649
  %v651 = vpop.f32.mrb[0].mxu0
  %v652 = vadd.f32 %v491, %v651
  %v653 = vpop.f32.mrb[0].mxu0
  %654 = vmatprep.mubr.f32.mxu0 0.0
  %v655 = vand.u32 %v138, 4294901760
  %v656 = vsub.f32 %v138, %v655
  %657 = vmatmul.mubr.f32.gmra.mrb[0].mxu0 %v656
  %v658 = vpop.f32.mrb[0].mxu0
  %v659 = vadd.f32 %v497, %v658
  %v660 = vpop.f32.mrb[0].mxu0
  %661 = vmatprep.mubr.f32.mxu0 0.0
  %v662 = vand.u32 %v141, 4294901760
  %v663 = vsub.f32 %v141, %v662
  %664 = vmatmul.mubr.f32.gmra.mrb[0].mxu0 %v663
  %v665 = vpop.f32.mrb[0].mxu0
  %v666 = vadd.f32 %v503, %v665
  %v667 = vpop.f32.mrb[0].mxu0
  %668 = vmatprep.mubr.f32.mxu0 0.0
  %v669 = vand.u32 %v144, 4294901760
  %v670 = vsub.f32 %v144, %v669
  %671 = vmatmul.mubr.f32.gmra.mrb[0].mxu0 %v670
  %v672 = vpop.f32.mrb[0].mxu0
  %v673 = vadd.f32 %v509, %v672
  %v674 = vpop.f32.mrb[0].mxu0
  %675 = vmatprep.mubr.f32.mxu0 0.0
  %v676 = vand.u32 %v147, 4294901760
  %v677 = vsub.f32 %v147, %v676
  %678 = vmatmul.mubr.f32.gmra.mrb[0].mxu0 %v677
  %v679 = vpop.f32.mrb[0].mxu0
  %v680 = vadd.f32 %v515, %v679
  %v681 = vpop.f32.mrb[0].mxu0
  %682 = vmatprep.mubr.f32.mxu0 0.0
  %v683 = vand.u32 %v150, 4294901760
  %v684 = vsub.f32 %v150, %v683
  %685 = vmatmul.mubr.f32.gmra.mrb[0].mxu0 %v684
  %v686 = vpop.f32.mrb[0].mxu0
  %v687 = vadd.f32 %v521, %v686
  %v688 = vpop.f32.mrb[0].mxu0
  %689 = vdwg.mxu0
  %690 = vmatprep.subr.mxu0 0.0
  %v691 = vand.u32 %v107, 4294901760
  %692 = vmatpush1.msra.mxu0 %v691
  %693 = vmatprep.subr.mxu0 0.0
  %v694 = vand.u32 %v108, 4294901760
  %695 = vmatpush1.msra.mxu0 %v694
  %696 = vmatprep.subr.mxu0 0.0
  %v697 = vand.u32 %v109, 4294901760
  %698 = vmatpush1.msra.mxu0 %v697
  %699 = vmatprep.subr.mxu0 0.0
  %v700 = vand.u32 %v110, 4294901760
  %701 = vmatpush1.msra.mxu0 %v700
  %702 = vmatprep.subr.mxu0 0.0
  %v703 = vand.u32 %v154, 4294901760
  %704 = vmatpush1.msra.mxu0 %v703
  %705 = vmatprep.subr.mxu0 0.0
  %706 = vmatpush1.msra.mxu0 0.0
  %707 = vmatprep.subr.mxu0 0.0
  %708 = vmatpush1.msra.mxu0 0.0
  %709 = vmatprep.subr.mxu0 0.0
  %710 = vmatpush1.msra.mxu0 0.0
  %711 = vmatprep.subr.mxu0 0.0
  %712 = vmatpush1.msra.mxu0 0.0
  %713 = vmatprep.subr.mxu0 0.0
  %714 = vmatpush1.msra.mxu0 0.0
  %715 = vmatprep.subr.mxu0 0.0
  %716 = vmatpush1.msra.mxu0 0.0
  %717 = vmatprep.subr.mxu0 0.0
  %718 = vmatpush1.msra.mxu0 0.0
  %719 = vmatprep.subr.mxu0 0.0
  %720 = vmatpush1.msra.mxu0 0.0
  %721 = vmatprep.subr.mxu0 0.0
  %722 = vmatpush1.msra.mxu0 0.0
  %723 = vmatprep.subr.mxu0 0.0
  %724 = vmatpush1.msra.mxu0 0.0
  %725 = vmatprep.subr.mxu0 0.0
  %726 = vmatpush1.msra.mxu0 0.0
  %727 = vmatprep.subr.mxu0 0.0
  %728 = vmatpush1.msra.mxu0 0.0
  %729 = vmatprep.subr.mxu0 0.0
  %730 = vmatpush1.msra.mxu0 0.0
  %731 = vmatprep.subr.mxu0 0.0
  %732 = vmatpush1.msra.mxu0 0.0
  %733 = vmatprep.subr.mxu0 0.0
  %734 = vmatpush1.msra.mxu0 0.0
  %735 = vmatprep.subr.mxu0 0.0
  %736 = vmatpush1.msra.mxu0 0.0
  %737 = vmatprep.subr.mxu0 0.0
  %738 = vmatpush1.msra.mxu0 0.0
  %739 = vmatprep.subr.mxu0 0.0
  %740 = vmatpush1.msra.mxu0 0.0
  %741 = vmatprep.subr.mxu0 0.0
  %742 = vmatpush1.msra.mxu0 0.0
  %743 = vmatprep.subr.mxu0 0.0
  %744 = vmatpush1.msra.mxu0 0.0
  %745 = vmatprep.subr.mxu0 0.0
  %746 = vmatpush1.msra.mxu0 0.0
  %747 = vmatprep.subr.mxu0 0.0
  %748 = vmatpush1.msra.mxu0 0.0
  %749 = vmatprep.subr.mxu0 0.0
  %750 = vmatpush1.msra.mxu0 0.0
  %751 = vmatprep.subr.mxu0 0.0
  %752 = vmatpush1.msra.mxu0 0.0
  %753 = vmatprep.subr.mxu0 0.0
  %754 = vmatpush1.msra.mxu0 0.0
  %755 = vmatprep.subr.mxu0 0.0
  %756 = vmatpush1.msra.mxu0 0.0
  %757 = vmatprep.subr.mxu0 0.0
  %758 = vmatpush1.msra.mxu0 0.0
  %759 = vmatprep.mubr.f32.mxu0 0.0
  %v760 = vand.u32 %v114, 4294901760
  %v761 = vsub.f32 %v114, %v760
  %v762 = vand.u32 %v761, 4294901760
  %763 = vmatmul.mubr.f32.gmra.mrb[0].mxu0 %v762
  %v764 = vpop.f32.mrb[0].mxu0
  %v765 = vadd.f32 %v603, %v764
  %v766 = vpop.f32.mrb[0].mxu0
  %767 = vmatprep.mubr.f32.mxu0 0.0
  %v768 = vand.u32 %v117, 4294901760
  %v769 = vsub.f32 %v117, %v768
  %v770 = vand.u32 %v769, 4294901760
  %771 = vmatmul.mubr.f32.gmra.mrb[0].mxu0 %v770
  %v772 = vpop.f32.mrb[0].mxu0
  %v773 = vadd.f32 %v610, %v772
  %v774 = vpop.f32.mrb[0].mxu0
  %775 = vmatprep.mubr.f32.mxu0 0.0
  %v776 = vand.u32 %v120, 4294901760
  %v777 = vsub.f32 %v120, %v776
  %v778 = vand.u32 %v777, 4294901760
  %779 = vmatmul.mubr.f32.gmra.mrb[0].mxu0 %v778
  %v780 = vpop.f32.mrb[0].mxu0
  %v781 = vadd.f32 %v617, %v780
  %v782 = vpop.f32.mrb[0].mxu0
  %783 = vmatprep.mubr.f32.mxu0 0.0
  %v784 = vand.u32 %v123, 4294901760
  %v785 = vsub.f32 %v123, %v784
  %v786 = vand.u32 %v785, 4294901760
  %787 = vmatmul.mubr.f32.gmra.mrb[0].mxu0 %v786
  %v788 = vpop.f32.mrb[0].mxu0
  %v789 = vadd.f32 %v624, %v788
  %v790 = vpop.f32.mrb[0].mxu0
  %791 = vmatprep.mubr.f32.mxu0 0.0
  %v792 = vand.u32 %v126, 4294901760
  %v793 = vsub.f32 %v126, %v792
  %v794 = vand.u32 %v793, 4294901760
  %795 = vmatmul.mubr.f32.gmra.mrb[0].mxu0 %v794
  %v796 = vpop.f32.mrb[0].mxu0
  %v797 = vadd.f32 %v631, %v796
  %v798 = vpop.f32.mrb[0].mxu0
  %799 = vmatprep.mubr.f32.mxu0 0.0
  %v800 = vand.u32 %v129, 4294901760
  %v801 = vsub.f32 %v129, %v800
  %v802 = vand.u32 %v801, 4294901760
  %803 = vmatmul.mubr.f32.gmra.mrb[0].mxu0 %v802
  %v804 = vpop.f32.mrb[0].mxu0
  %v805 = vadd.f32 %v638, %v804
  %v806 = vpop.f32.mrb[0].mxu0
  %807 = vmatprep.mubr.f32.mxu0 0.0
  %v808 = vand.u32 %v132, 4294901760
  %v809 = vsub.f32 %v132, %v808
  %v810 = vand.u32 %v809, 4294901760
  %811 = vmatmul.mubr.f32.gmra.mrb[0].mxu0 %v810
  %v812 = vpop.f32.mrb[0].mxu0
  %v813 = vadd.f32 %v645, %v812
  %v814 = vpop.f32.mrb[0].mxu0
  %815 = vmatprep.mubr.f32.mxu0 0.0
  %v816 = vand.u32 %v135, 4294901760
  %v817 = vsub.f32 %v135, %v816
  %v818 = vand.u32 %v817, 4294901760
  %819 = vmatmul.mubr.f32.gmra.mrb[0].mxu0 %v818
  %v820 = vpop.f32.mrb[0].mxu0
  %v821 = vadd.f32 %v652, %v820
  %v822 = vpop.f32.mrb[0].mxu0
  %823 = vmatprep.mubr.f32.mxu0 0.0
  %v824 = vand.u32 %v138, 4294901760
  %v825 = vsub.f32 %v138, %v824
  %v826 = vand.u32 %v825, 4294901760
  %827 = vmatmul.mubr.f32.gmra.mrb[0].mxu0 %v826
  %v828 = vpop.f32.mrb[0].mxu0
  %v829 = vadd.f32 %v659, %v828
  %v830 = vpop.f32.mrb[0].mxu0
  %831 = vmatprep.mubr.f32.mxu0 0.0
  %v832 = vand.u32 %v141, 4294901760
  %v833 = vsub.f32 %v141, %v832
  %v834 = vand.u32 %v833, 4294901760
  %835 = vmatmul.mubr.f32.gmra.mrb[0].mxu0 %v834
  %v836 = vpop.f32.mrb[0].mxu0
  %v837 = vadd.f32 %v666, %v836
  %v838 = vpop.f32.mrb[0].mxu0
  %839 = vmatprep.mubr.f32.mxu0 0.0
  %v840 = vand.u32 %v144, 4294901760
  %v841 = vsub.f32 %v144, %v840
  %v842 = vand.u32 %v841, 4294901760
  %843 = vmatmul.mubr.f32.gmra.mrb[0].mxu0 %v842
  %v844 = vpop.f32.mrb[0].mxu0
  %v845 = vadd.f32 %v673, %v844
  %v846 = vpop.f32.mrb[0].mxu0
  %847 = vmatprep.mubr.f32.mxu0 0.0
  %v848 = vand.u32 %v147, 4294901760
  %v849 = vsub.f32 %v147, %v848
  %v850 = vand.u32 %v849, 4294901760
  %851 = vmatmul.mubr.f32.gmra.mrb[0].mxu0 %v850
  %v852 = vpop.f32.mrb[0].mxu0
  %v853 = vadd.f32 %v680, %v852
  %v854 = vpop.f32.mrb[0].mxu0
  %855 = vmatprep.mubr.f32.mxu0 0.0
  %v856 = vand.u32 %v150, 4294901760
  %v857 = vsub.f32 %v150, %v856
  %v858 = vand.u32 %v857, 4294901760
  %859 = vmatmul.mubr.f32.gmra.mrb[0].mxu0 %v858
  %v860 = vpop.f32.mrb[0].mxu0
  %v861 = vadd.f32 %v687, %v860
  %v862 = vpop.f32.mrb[0].mxu0
  %863 = vdwg.mxu0
  %864 = vmatprep.subr.mxu0 0.0
  %v865 = vand.u32 %v107, 4294901760
  %v866 = vsub.f32 %v107, %v865
  %v867 = vand.u32 %v866, 4294901760
  %868 = vmatpush1.msra.mxu0 %v867
  %869 = vmatprep.subr.mxu0 0.0
  %v870 = vand.u32 %v108, 4294901760
  %v871 = vsub.f32 %v108, %v870
  %v872 = vand.u32 %v871, 4294901760
  %873 = vmatpush1.msra.mxu0 %v872
  %874 = vmatprep.subr.mxu0 0.0
  %v875 = vand.u32 %v109, 4294901760
  %v876 = vsub.f32 %v109, %v875
  %v877 = vand.u32 %v876, 4294901760
  %878 = vmatpush1.msra.mxu0 %v877
  %879 = vmatprep.subr.mxu0 0.0
  %v880 = vand.u32 %v110, 4294901760
  %v881 = vsub.f32 %v110, %v880
  %v882 = vand.u32 %v881, 4294901760
  %883 = vmatpush1.msra.mxu0 %v882
  %884 = vmatprep.subr.mxu0 0.0
  %v885 = vand.u32 %v154, 4294901760
  %v886 = vsub.f32 %v154, %v885
  %v887 = vand.u32 %v886, 4294901760
  %888 = vmatpush1.msra.mxu0 %v887
  %889 = vmatprep.subr.mxu0 0.0
  %890 = vmatpush1.msra.mxu0 0.0
  %891 = vmatprep.subr.mxu0 0.0
  %892 = vmatpush1.msra.mxu0 0.0
  %893 = vmatprep.subr.mxu0 0.0
  %894 = vmatpush1.msra.mxu0 0.0
  %895 = vmatprep.subr.mxu0 0.0
  %896 = vmatpush1.msra.mxu0 0.0
  %897 = vmatprep.subr.mxu0 0.0
  %898 = vmatpush1.msra.mxu0 0.0
  %899 = vmatprep.subr.mxu0 0.0
  %900 = vmatpush1.msra.mxu0 0.0
  %901 = vmatprep.subr.mxu0 0.0
  %902 = vmatpush1.msra.mxu0 0.0
  %903 = vmatprep.subr.mxu0 0.0
  %904 = vmatpush1.msra.mxu0 0.0
  %905 = vmatprep.subr.mxu0 0.0
  %906 = vmatpush1.msra.mxu0 0.0
  %907 = vmatprep.subr.mxu0 0.0
  %908 = vmatpush1.msra.mxu0 0.0
  %909 = vmatprep.subr.mxu0 0.0
  %910 = vmatpush1.msra.mxu0 0.0
  %911 = vmatprep.subr.mxu0 0.0
  %912 = vmatpush1.msra.mxu0 0.0
  %913 = vmatprep.subr.mxu0 0.0
  %914 = vmatpush1.msra.mxu0 0.0
  %915 = vmatprep.subr.mxu0 0.0
  %916 = vmatpush1.msra.mxu0 0.0
  %917 = vmatprep.subr.mxu0 0.0
  %918 = vmatpush1.msra.mxu0 0.0
  %919 = vmatprep.subr.mxu0 0.0
  %920 = vmatpush1.msra.mxu0 0.0
  %921 = vmatprep.subr.mxu0 0.0
  %922 = vmatpush1.msra.mxu0 0.0
  %923 = vmatprep.subr.mxu0 0.0
  %924 = vmatpush1.msra.mxu0 0.0
  %925 = vmatprep.subr.mxu0 0.0
  %926 = vmatpush1.msra.mxu0 0.0
  %927 = vmatprep.subr.mxu0 0.0
  %928 = vmatpush1.msra.mxu0 0.0
  %929 = vmatprep.subr.mxu0 0.0
  %930 = vmatpush1.msra.mxu0 0.0
  %931 = vmatprep.subr.mxu0 0.0
  %932 = vmatpush1.msra.mxu0 0.0
  %933 = vmatprep.subr.mxu0 0.0
  %934 = vmatpush1.msra.mxu0 0.0
  %935 = vmatprep.subr.mxu0 0.0
  %936 = vmatpush1.msra.mxu0 0.0
  %937 = vmatprep.subr.mxu0 0.0
  %938 = vmatpush1.msra.mxu0 0.0
  %939 = vmatprep.subr.mxu0 0.0
  %940 = vmatpush1.msra.mxu0 0.0
  %941 = vmatprep.subr.mxu0 0.0
  %942 = vmatpush1.msra.mxu0 0.0
  %943 = vmatprep.mubr.f32.mxu0 0.0
  %v944 = vand.u32 %v114, 4294901760
  %945 = vmatmul.mubr.f32.gmra.mrb[0].mxu0 %v944
  %v946 = vpop.f32.mrb[0].mxu0
  %v947 = vadd.f32 %v765, %v946
  %v948 = vpop.f32.mrb[0].mxu0
  %949 = vmatprep.mubr.f32.mxu0 0.0
  %v950 = vand.u32 %v117, 4294901760
  %951 = vmatmul.mubr.f32.gmra.mrb[0].mxu0 %v950
  %v952 = vpop.f32.mrb[0].mxu0
  %v953 = vadd.f32 %v773, %v952
  %v954 = vpop.f32.mrb[0].mxu0
  %955 = vmatprep.mubr.f32.mxu0 0.0
  %v956 = vand.u32 %v120, 4294901760
  %957 = vmatmul.mubr.f32.gmra.mrb[0].mxu0 %v956
  %v958 = vpop.f32.mrb[0].mxu0
  %v959 = vadd.f32 %v781, %v958
  %v960 = vpop.f32.mrb[0].mxu0
  %961 = vmatprep.mubr.f32.mxu0 0.0
  %v962 = vand.u32 %v123, 4294901760
  %963 = vmatmul.mubr.f32.gmra.mrb[0].mxu0 %v962
  %v964 = vpop.f32.mrb[0].mxu0
  %v965 = vadd.f32 %v789, %v964
  %v966 = vpop.f32.mrb[0].mxu0
  %967 = vmatprep.mubr.f32.mxu0 0.0
  %v968 = vand.u32 %v126, 4294901760
  %969 = vmatmul.mubr.f32.gmra.mrb[0].mxu0 %v968
  %v970 = vpop.f32.mrb[0].mxu0
  %v971 = vadd.f32 %v797, %v970
  %v972 = vpop.f32.mrb[0].mxu0
  %973 = vmatprep.mubr.f32.mxu0 0.0
  %v974 = vand.u32 %v129, 4294901760
  %975 = vmatmul.mubr.f32.gmra.mrb[0].mxu0 %v974
  %v976 = vpop.f32.mrb[0].mxu0
  %v977 = vadd.f32 %v805, %v976
  %v978 = vpop.f32.mrb[0].mxu0
  %979 = vmatprep.mubr.f32.mxu0 0.0
  %v980 = vand.u32 %v132, 4294901760
  %981 = vmatmul.mubr.f32.gmra.mrb[0].mxu0 %v980
  %v982 = vpop.f32.mrb[0].mxu0
  %v983 = vadd.f32 %v813, %v982
  %v984 = vpop.f32.mrb[0].mxu0
  %985 = vmatprep.mubr.f32.mxu0 0.0
  %v986 = vand.u32 %v135, 4294901760
  %987 = vmatmul.mubr.f32.gmra.mrb[0].mxu0 %v986
  %v988 = vpop.f32.mrb[0].mxu0
  %v989 = vadd.f32 %v821, %v988
  %v990 = vpop.f32.mrb[0].mxu0
  %991 = vmatprep.mubr.f32.mxu0 0.0
  %v992 = vand.u32 %v138, 4294901760
  %993 = vmatmul.mubr.f32.gmra.mrb[0].mxu0 %v992
  %v994 = vpop.f32.mrb[0].mxu0
  %v995 = vadd.f32 %v829, %v994
  %v996 = vpop.f32.mrb[0].mxu0
  %997 = vmatprep.mubr.f32.mxu0 0.0
  %v998 = vand.u32 %v141, 4294901760
  %999 = vmatmul.mubr.f32.gmra.mrb[0].mxu0 %v998
  %v1000 = vpop.f32.mrb[0].mxu0
  %v1001 = vadd.f32 %v837, %v1000
  %v1002 = vpop.f32.mrb[0].mxu0
  %1003 = vmatprep.mubr.f32.mxu0 0.0
  %v1004 = vand.u32 %v144, 4294901760
  %1005 = vmatmul.mubr.f32.gmra.mrb[0].mxu0 %v1004
  %v1006 = vpop.f32.mrb[0].mxu0
  %v1007 = vadd.f32 %v845, %v1006
  %v1008 = vpop.f32.mrb[0].mxu0
  %1009 = vmatprep.mubr.f32.mxu0 0.0
  %v1010 = vand.u32 %v147, 4294901760
  %1011 = vmatmul.mubr.f32.gmra.mrb[0].mxu0 %v1010
  %v1012 = vpop.f32.mrb[0].mxu0
  %v1013 = vadd.f32 %v853, %v1012
  %v1014 = vpop.f32.mrb[0].mxu0
  %1015 = vmatprep.mubr.f32.mxu0 0.0
  %v1016 = vand.u32 %v150, 4294901760
  %1017 = vmatmul.mubr.f32.gmra.mrb[0].mxu0 %v1016
  %v1018 = vpop.f32.mrb[0].mxu0
  %v1019 = vadd.f32 %v861, %v1018
  %v1020 = vpop.f32.mrb[0].mxu0
  %1021 = vdwg.mxu0
  %1022 = vmatprep.subr.mxu0 0.0
  %v1023 = vand.u32 %v107, 4294901760
  %1024 = vmatpush1.msra.mxu0 %v1023
  %1025 = vmatprep.subr.mxu0 0.0
  %v1026 = vand.u32 %v108, 4294901760
  %1027 = vmatpush1.msra.mxu0 %v1026
  %1028 = vmatprep.subr.mxu0 0.0
  %v1029 = vand.u32 %v109, 4294901760
  %1030 = vmatpush1.msra.mxu0 %v1029
  %1031 = vmatprep.subr.mxu0 0.0
  %v1032 = vand.u32 %v110, 4294901760
  %1033 = vmatpush1.msra.mxu0 %v1032
  %1034 = vmatprep.subr.mxu0 0.0
  %v1035 = vand.u32 %v154, 4294901760
  %1036 = vmatpush1.msra.mxu0 %v1035
  %1037 = vmatprep.subr.mxu0 0.0
  %1038 = vmatpush1.msra.mxu0 0.0
  %1039 = vmatprep.subr.mxu0 0.0
  %1040 = vmatpush1.msra.mxu0 0.0
  %1041 = vmatprep.subr.mxu0 0.0
  %1042 = vmatpush1.msra.mxu0 0.0
  %1043 = vmatprep.subr.mxu0 0.0
  %1044 = vmatpush1.msra.mxu0 0.0
  %1045 = vmatprep.subr.mxu0 0.0
  %1046 = vmatpush1.msra.mxu0 0.0
  %1047 = vmatprep.subr.mxu0 0.0
  %1048 = vmatpush1.msra.mxu0 0.0
  %1049 = vmatprep.subr.mxu0 0.0
  %1050 = vmatpush1.msra.mxu0 0.0
  %1051 = vmatprep.subr.mxu0 0.0
  %1052 = vmatpush1.msra.mxu0 0.0
  %1053 = vmatprep.subr.mxu0 0.0
  %1054 = vmatpush1.msra.mxu0 0.0
  %1055 = vmatprep.subr.mxu0 0.0
  %1056 = vmatpush1.msra.mxu0 0.0
  %1057 = vmatprep.subr.mxu0 0.0
  %1058 = vmatpush1.msra.mxu0 0.0
  %1059 = vmatprep.subr.mxu0 0.0
  %1060 = vmatpush1.msra.mxu0 0.0
  %1061 = vmatprep.subr.mxu0 0.0
  %1062 = vmatpush1.msra.mxu0 0.0
  %1063 = vmatprep.subr.mxu0 0.0
  %1064 = vmatpush1.msra.mxu0 0.0
  %1065 = vmatprep.subr.mxu0 0.0
  %1066 = vmatpush1.msra.mxu0 0.0
  %1067 = vmatprep.subr.mxu0 0.0
  %1068 = vmatpush1.msra.mxu0 0.0
  %1069 = vmatprep.subr.mxu0 0.0
  %1070 = vmatpush1.msra.mxu0 0.0
  %1071 = vmatprep.subr.mxu0 0.0
  %1072 = vmatpush1.msra.mxu0 0.0
  %1073 = vmatprep.subr.mxu0 0.0
  %1074 = vmatpush1.msra.mxu0 0.0
  %1075 = vmatprep.subr.mxu0 0.0
  %1076 = vmatpush1.msra.mxu0 0.0
  %1077 = vmatprep.subr.mxu0 0.0
  %1078 = vmatpush1.msra.mxu0 0.0
  %1079 = vmatprep.subr.mxu0 0.0
  %1080 = vmatpush1.msra.mxu0 0.0
  %1081 = vmatprep.subr.mxu0 0.0
  %1082 = vmatpush1.msra.mxu0 0.0
  %1083 = vmatprep.subr.mxu0 0.0
  %1084 = vmatpush1.msra.mxu0 0.0
  %1085 = vmatprep.subr.mxu0 0.0
  %1086 = vmatpush1.msra.mxu0 0.0
  %1087 = vmatprep.subr.mxu0 0.0
  %1088 = vmatpush1.msra.mxu0 0.0
  %1089 = vmatprep.subr.mxu0 0.0
  %1090 = vmatpush1.msra.mxu0 0.0
  %1091 = vmatprep.mubr.f32.mxu0 0.0
  %v1092 = vand.u32 %v114, 4294901760
  %1093 = vmatmul.mubr.f32.gmra.mrb[0].mxu0 %v1092
  %v1094 = vpop.f32.mrb[0].mxu0
  %v1095 = vadd.f32 %v947, %v1094
  %v1096 = vpop.f32.mrb[0].mxu0
  %1097 = vmatprep.mubr.f32.mxu0 0.0
  %v1098 = vand.u32 %v117, 4294901760
  %1099 = vmatmul.mubr.f32.gmra.mrb[0].mxu0 %v1098
  %v1100 = vpop.f32.mrb[0].mxu0
  %v1101 = vadd.f32 %v953, %v1100
  %v1102 = vpop.f32.mrb[0].mxu0
  %1103 = vmatprep.mubr.f32.mxu0 0.0
  %v1104 = vand.u32 %v120, 4294901760
  %1105 = vmatmul.mubr.f32.gmra.mrb[0].mxu0 %v1104
  %v1106 = vpop.f32.mrb[0].mxu0
  %v1107 = vadd.f32 %v959, %v1106
  %v1108 = vpop.f32.mrb[0].mxu0
  %1109 = vmatprep.mubr.f32.mxu0 0.0
  %v1110 = vand.u32 %v123, 4294901760
  %1111 = vmatmul.mubr.f32.gmra.mrb[0].mxu0 %v1110
  %v1112 = vpop.f32.mrb[0].mxu0
  %v1113 = vadd.f32 %v965, %v1112
  %v1114 = vpop.f32.mrb[0].mxu0
  %1115 = vmatprep.mubr.f32.mxu0 0.0
  %v1116 = vand.u32 %v126, 4294901760
  %1117 = vmatmul.mubr.f32.gmra.mrb[0].mxu0 %v1116
  %v1118 = vpop.f32.mrb[0].mxu0
  %v1119 = vadd.f32 %v971, %v1118
  %v1120 = vpop.f32.mrb[0].mxu0
  %1121 = vmatprep.mubr.f32.mxu0 0.0
  %v1122 = vand.u32 %v129, 4294901760
  %1123 = vmatmul.mubr.f32.gmra.mrb[0].mxu0 %v1122
  %v1124 = vpop.f32.mrb[0].mxu0
  %v1125 = vadd.f32 %v977, %v1124
  %v1126 = vpop.f32.mrb[0].mxu0
  %1127 = vmatprep.mubr.f32.mxu0 0.0
  %v1128 = vand.u32 %v132, 4294901760
  %1129 = vmatmul.mubr.f32.gmra.mrb[0].mxu0 %v1128
  %v1130 = vpop.f32.mrb[0].mxu0
  %v1131 = vadd.f32 %v983, %v1130
  %v1132 = vpop.f32.mrb[0].mxu0
  %1133 = vmatprep.mubr.f32.mxu0 0.0
  %v1134 = vand.u32 %v135, 4294901760
  %1135 = vmatmul.mubr.f32.gmra.mrb[0].mxu0 %v1134
  %v1136 = vpop.f32.mrb[0].mxu0
  %v1137 = vadd.f32 %v989, %v1136
  %v1138 = vpop.f32.mrb[0].mxu0
  %1139 = vmatprep.mubr.f32.mxu0 0.0
  %v1140 = vand.u32 %v138, 4294901760
  %1141 = vmatmul.mubr.f32.gmra.mrb[0].mxu0 %v1140
  %v1142 = vpop.f32.mrb[0].mxu0
  %v1143 = vadd.f32 %v995, %v1142
  %v1144 = vpop.f32.mrb[0].mxu0
  %1145 = vmatprep.mubr.f32.mxu0 0.0
  %v1146 = vand.u32 %v141, 4294901760
  %1147 = vmatmul.mubr.f32.gmra.mrb[0].mxu0 %v1146
  %v1148 = vpop.f32.mrb[0].mxu0
  %v1149 = vadd.f32 %v1001, %v1148
  %v1150 = vpop.f32.mrb[0].mxu0
  %1151 = vmatprep.mubr.f32.mxu0 0.0
  %v1152 = vand.u32 %v144, 4294901760
  %1153 = vmatmul.mubr.f32.gmra.mrb[0].mxu0 %v1152
  %v1154 = vpop.f32.mrb[0].mxu0
  %v1155 = vadd.f32 %v1007, %v1154
  %v1156 = vpop.f32.mrb[0].mxu0
  %1157 = vmatprep.mubr.f32.mxu0 0.0
  %v1158 = vand.u32 %v147, 4294901760
  %1159 = vmatmul.mubr.f32.gmra.mrb[0].mxu0 %v1158
  %v1160 = vpop.f32.mrb[0].mxu0
  %v1161 = vadd.f32 %v1013, %v1160
  %v1162 = vpop.f32.mrb[0].mxu0
  %1163 = vmatprep.mubr.f32.mxu0 0.0
  %v1164 = vand.u32 %v150, 4294901760
  %1165 = vmatmul.mubr.f32.gmra.mrb[0].mxu0 %v1164
  %v1166 = vpop.f32.mrb[0].mxu0
  %v1167 = vadd.f32 %v1019, %v1166
  %v1168 = vpop.f32.mrb[0].mxu0
  %1169 = vdwg.mxu0
  %v1170 = vld [vmem:[%s2] sm:$0xff]
  %v1171 = vld [vmem:[%s2 + $0x8] sm:$0xff]
  %v1172 = vld [vmem:[%s2 + $0x10] sm:$0xff]
  %v1173 = vld [vmem:[%s2 + $0x18] sm:$0xff]
  %v1174 = vld [vmem:[%s2 + $0x20] sm:$0xff]
  %v1175 = vld [vmem:[%s2 + $0x28] sm:$0xff]
  %v1176 = vld [vmem:[%s2 + $0x30] sm:$0x3]
  %v1177 = vadd.f32 %v1095, %v1170
  %v1178 = vadd.f32 %v1101, %v1171
  %v1179 = vadd.f32 %v1107, %v1172
  %v1180 = vadd.f32 %v1113, %v1173
  %v1181 = vadd.f32 %v1119, %v1174
  %v1182 = vadd.f32 %v1125, %v1175
  %v1183 = vadd.f32 %v1131, %v1176
  %vm1184 = vcmask 261120
  %1185 = vst.msk [vmem:[%s3] sm:$0xff] %vm1184, %v1177
  %1186 = vst.msk [vmem:[%s3 + $0x8] sm:$0xff] %vm1184, %v1178
  %1187 = vst.msk [vmem:[%s3 + $0x10] sm:$0xff] %vm1184, %v1179
  %1188 = vst.msk [vmem:[%s3 + $0x18] sm:$0xff] %vm1184, %v1180
  %1189 = vst.msk [vmem:[%s3 + $0x20] sm:$0xff] %vm1184, %v1181
  %1190 = vst.msk [vmem:[%s3 + $0x28] sm:$0xff] %vm1184, %v1182
  %vm1191 = vcmask 254976
  %1192 = vst.msk [vmem:[%s3 + $0x30] sm:$0x3] %vm1191, %v1183
  %vm1200 = vcmask 1041408
  %v1201 = vrot.slane %v1170, 6
  %v1202 = vrot.slane %v1171, 6
  %v1203 = vsel %vm1200, %v1201, %v1202
  %v1204 = vrot.slane %v1172, 6
  %v1205 = vsel %vm1200, %v1202, %v1204
  %v1206 = vrot.slane %v1173, 6
  %v1207 = vsel %vm1200, %v1204, %v1206
  %v1208 = vrot.slane %v1174, 6
  %v1209 = vsel %vm1200, %v1206, %v1208
  %v1210 = vrot.slane %v1175, 6
  %v1211 = vsel %vm1200, %v1208, %v1210
  %v1212 = vrot.slane %v1176, 6
  %v1213 = vsel %vm1200, %v1210, %v1212
  %v1221 = vadd.f32 %v1131, %v1201
  %v1222 = vadd.f32 %v1137, %v1203
  %v1223 = vadd.f32 %v1143, %v1205
  %v1224 = vadd.f32 %v1149, %v1207
  %v1225 = vadd.f32 %v1155, %v1209
  %v1226 = vadd.f32 %v1161, %v1211
  %v1227 = vadd.f32 %v1167, %v1213
  %vm1228 = vcmask 261122
  %1229 = vst.msk [vmem:[%s3 + $0x30] sm:$0xfc] %vm1228, %v1221
  %1230 = vst.msk [vmem:[%s3 + $0x38] sm:$0xff] %vm1184, %v1222
  %1231 = vst.msk [vmem:[%s3 + $0x40] sm:$0xff] %vm1184, %v1223
  %1232 = vst.msk [vmem:[%s3 + $0x48] sm:$0xff] %vm1184, %v1224
  %1233 = vst.msk [vmem:[%s3 + $0x50] sm:$0xff] %vm1184, %v1225
  %1234 = vst.msk [vmem:[%s3 + $0x58] sm:$0xff] %vm1184, %v1226
  %vm1235 = vcmask 257024
  %1236 = vst.msk [vmem:[%s3 + $0x60] sm:$0xf] %vm1235, %v1227
  // Predicated region
  $region14: #{tpu_custom_call.1} parent=0 // pred_check
    _
  $region15: #{tpu_custom_call.1} parent=0 // pred_check_branch
    %1238 = sbr.rel (0) target = $region17
  $region16: #{tpu_custom_call.1} parent=0 // pred_region
    _
  $region17: #{tpu_custom_call.1} parent=0 // pred_fallthru
    _
  // Predicated region
  $region18: #{tpu_custom_call.1} parent=0 // pred_check
    _
  $region19: #{tpu_custom_call.1} parent=0 // pred_check_branch
    %1240 = sbr.rel (0) target = $region21
  $region20: #{tpu_custom_call.1} parent=0 // pred_region
    _
  $region21: #{tpu_custom_call.1} parent=0 // pred_fallthru
    _

</llo_original>
